<compile_context>
chip_gen: v7x
topology: tpu7x:2x2x1
jax: 0.10.0
libtpu: 0.0.40
codegen_flags: <defaults>
</compile_context>

<pallas_src>
import jax
import jax.numpy as jnp
from jax.experimental import pallas as pl
from jax.experimental.pallas import tpu as pltpu


def _round_up(x, m):
    return ((x + m - 1) // m) * m


# -----------------------------------------------------------------------------
# Pallas kernel: y = x @ W + b   (scale already folded into W, b)
# -----------------------------------------------------------------------------
def _fused_gemv_kernel(x_ref, w_ref, b_ref, o_ref):
    # x_ref: (M, n_hid)  w_ref: (n_hid, total_out_padded)   -- compute dtype (bf16)
    # b_ref: (1, total_out_padded)  o_ref: (M, total_out_padded)  -- f32
    # bf16 operands feed the MXU natively; accumulation and the bias add stay
    # in f32 (no bf16 elementwise math -> safe on v5e as well).
    o_ref[...] = (
        jnp.dot(x_ref[...], w_ref[...], preferred_element_type=jnp.float32)
        + b_ref[...]
    )


def fused_linear(x, w_cat, b_cat2d):
    """x: (M, n_hid), w_cat: (n_hid, total_out_padded), b_cat2d: (1, total_out_padded).

    One grid-less Pallas call: each operand is a single full-extent VMEM block
    (one DMA per operand, no per-grid-step bookkeeping).  Returns
    (M, total_out_padded) f32.
    """
    m, n_hid = x.shape
    _, total_out_p = w_cat.shape
    cost = pl.CostEstimate(
        flops=2 * m * n_hid * total_out_p,
        transcendentals=0,
        bytes_accessed=(
            x.size * x.dtype.itemsize
            + w_cat.size * w_cat.dtype.itemsize
            + b_cat2d.size * 4
            + m * total_out_p * 4
        ),
    )
    return pl.pallas_call(
        _fused_gemv_kernel,
        out_shape=jax.ShapeDtypeStruct((m, total_out_p), jnp.float32),
        in_specs=[
            pl.BlockSpec(memory_space=pltpu.MemorySpace.VMEM),  # rep(s)
            pl.BlockSpec(memory_space=pltpu.MemorySpace.VMEM),  # fused weights
            pl.BlockSpec(memory_space=pltpu.MemorySpace.VMEM),  # fused biases
        ],
        out_specs=pl.BlockSpec(memory_space=pltpu.MemorySpace.VMEM),
        cost_estimate=cost,
    )(x, w_cat, b_cat2d)


# -----------------------------------------------------------------------------
# LstmParameterizer (JAX / Pallas version)
# -----------------------------------------------------------------------------
class LstmParameterizer:
    """JAX port of the PyTorch LstmParameterizer.

    Parameters are initialized deterministically with uniform(-1/sqrt(fan_in),
    1/sqrt(fan_in)), matching nn.Linear's default scheme.  The four Linear
    heads are stored fused: weights pre-transposed to (n_hid, out),
    concatenated along the output axis, scale folded in, zero-padded to a
    lane-aligned width, and cast to `param_dtype` (bf16 by default).
    """

    def __init__(self, n_hid, n_inp, n_enc, scale, key, param_dtype=jnp.bfloat16):
        self.n_hid = n_hid
        self.n_inp = n_inp
        self.n_enc = n_enc
        self.scale = scale

        # Output sizes of the four heads, in forward() order.
        self.head_sizes = (
            n_inp * n_enc * 4,   # w_ih
            n_enc * n_enc * 4,   # w_hh
            n_enc * 4,           # b_ih
            n_enc * 4,           # b_hh
        )
        self.total_out = sum(self.head_sizes)
        # Pad to the next multiple of 128 so the output slab is lane-dense for
        # any config (unmasked stores); padding is sliced off in the wrapper.
        self.total_out_padded = max(_round_up(self.total_out, 128), 128)

        bound = 1.0 / float(n_hid) ** 0.5
        ws, bs = [], []
        for k, out_f in zip(jax.random.split(key, 4), self.head_sizes):
            kw, kb = jax.random.split(k)
            # PyTorch stores weight as (out, in); we keep the transposed
            # (in, out) layout the kernel wants.
            w_t = jax.random.uniform(kw, (n_hid, out_f), jnp.float32, -bound, bound)
            b = jax.random.uniform(kb, (out_f,), jnp.float32, -bound, bound)
            ws.append(w_t)
            bs.append(b)

        # Fold the scalar `scale` into the static parameters (one-time cost).
        w_cat = jnp.concatenate(ws, axis=1) * jnp.float32(scale)
        b_cat = jnp.concatenate(bs, axis=0) * jnp.float32(scale)

        pad = self.total_out_padded - self.total_out
        if pad:
            w_cat = jnp.pad(w_cat, ((0, 0), (0, pad)))
            b_cat = jnp.pad(b_cat, (0, pad))

        # Weights in param_dtype (bf16 by default) -> native MXU path + half
        # the weight DMA.  Bias kept in f32 (elementwise add stays f32).
        self.w_cat = w_cat.astype(param_dtype)
        self.b_cat2d = b_cat.reshape(1, self.total_out_padded).astype(jnp.float32)

        # Whole forward (kernel + slab split + reshapes) under a single jit so
        # per-call dispatch overhead and the reshape ops fuse away.
        self._forward = jax.jit(self._make_forward(batched=False))
        self._forward_batched = jax.jit(self._make_forward(batched=True))

        # TODO(synk): the PyTorch module's self._xdemo_lstm (nn.LSTM(n_emb,
        # n_hid, 1)) holds parameters but is never used in forward(); it is
        # not instantiated here.

    def _make_forward(self, batched):
        n_inp, n_enc = self.n_inp, self.n_enc
        s0, s1, s2, s3 = self.head_sizes
        total_out = self.total_out

        def forward(rep, w_cat, b_cat2d):
            x = rep.reshape(-1, rep.shape[-1]).astype(w_cat.dtype)
            y = fused_linear(x, w_cat, b_cat2d)[:, :total_out]
            if not batched:
                y = y[0]
                w_ih = y[:s0].reshape(n_enc * 4, n_inp)
                w_hh = y[s0:s0 + s1].reshape(n_enc * 4, n_enc)
                b_ih = y[s0 + s1:s0 + s1 + s2]
                b_hh = y[s0 + s1 + s2:]
            else:
                B = y.shape[0]
                w_ih = y[:, :s0].reshape(B, n_enc * 4, n_inp)
                w_hh = y[:, s0:s0 + s1].reshape(B, n_enc * 4, n_enc)
                b_ih = y[:, s0 + s1:s0 + s1 + s2]
                b_hh = y[:, s0 + s1 + s2:]
            return (w_ih, w_hh, b_ih, b_hh)

        return forward

    def __call__(self, rep):
        assert rep.ndim == 1 and rep.shape[0] == self.n_hid
        return self._forward(rep, self.w_cat, self.b_cat2d)

    def forward_batched(self, reps):
        """reps: (B, n_hid).  Amortizes launch overhead + weight DMA over B.

        TODO(synk): on v7x, for large B, add an M-tiled grid with
        dimension_semantics=("parallel", ...) to shard across the 2 TensorCores.
        """
        assert reps.ndim == 2 and reps.shape[1] == self.n_hid
        return self._forward_batched(reps, self.w_cat, self.b_cat2d)


# -----------------------------------------------------------------------------
# Pure-JAX reference for correctness checking.  Uses the SAME stored (scaled,
# padded, dtype-cast) parameters upcast to f32, so it validates exactly what
# the kernel computes (the scale fold / padding / bf16 cast are init-time
# transformations, not per-call math).
# -----------------------------------------------------------------------------
def reference_forward(model, rep):
    n_inp, n_enc = model.n_inp, model.n_enc
    s0, s1, s2, s3 = model.head_sizes
    x = rep.astype(model.w_cat.dtype).astype(jnp.float32)
    w = model.w_cat[:, :model.total_out].astype(jnp.float32)
    b = model.b_cat2d[0, :model.total_out]
    y = x @ w + b
    w_ih = y[:s0].reshape(n_enc * 4, n_inp)
    w_hh = y[s0:s0 + s1].reshape(n_enc * 4, n_enc)
    b_ih = y[s0 + s1:s0 + s1 + s2]
    b_hh = y[s0 + s1 + s2:s0 + s1 + s2 + s3]
    return (w_ih, w_hh, b_ih, b_hh)


def _check_config(n_hid, n_inp, n_enc, scale, seed):
    key = jax.random.PRNGKey(seed)
    k_params, k_rep, k_batch = jax.random.split(key, 3)

    model = LstmParameterizer(n_hid, n_inp, n_enc, scale, k_params)
    rep = jax.random.normal(k_rep, (n_hid,), jnp.float32)

    outs = jax.block_until_ready(model(rep))
    refs = reference_forward(model, rep)

    names = ("w_ih", "w_hh", "b_ih", "b_hh")
    expected_shapes = (
        (n_enc * 4, n_inp),
        (n_enc * 4, n_enc),
        (n_enc * 4,),
        (n_enc * 4,),
    )
    for name, o, r, es in zip(names, outs, refs, expected_shapes):
        assert o.shape == es, f"{name}: shape {o.shape} != {es}"
        assert jnp.allclose(o, r, atol=2e-5, rtol=2e-5), f"{name}: mismatch"

    # Batched path: B reps through one fused call; check row 0 and row B-1.
    B = 8
    reps = jax.random.normal(k_batch, (B, n_hid), jnp.float32)
    bouts = jax.block_until_ready(model.forward_batched(reps))
    for row in (0, B - 1):
        rrefs = reference_forward(model, reps[row])
        for name, bo, r in zip(names, bouts, rrefs):
            assert jnp.allclose(bo[row], r, atol=2e-5, rtol=2e-5), \
                f"batched {name}[{row}]: mismatch"


if __name__ == "__main__":
    # Config A: demo shapes; total_out = 8*16*4 + 16*16*4 + 64 + 64 = 1664 (13*128).
    _check_config(n_hid=32, n_inp=8, n_enc=16, scale=0.5, seed=0)
    # Config B: non-lane-aligned head sizes; total_out = 120 -> padded to 128,
    # exercises the zero-padding + wrapper-slice path.
    _check_config(n_hid=32, n_inp=5, n_enc=3, scale=1.3, seed=1)

    print("KERNEL_OK")
</pallas_src>

<mosaic_0001>
module attributes {stable_mosaic.version = 11 : i64} {
  func.func @_fused_gemv_kernel(%arg0: memref<1x32xbf16, #tpu.memory_space<vmem>>, %arg1: memref<32x1664xbf16, #tpu.memory_space<vmem>>, %arg2: memref<1x1664xf32, #tpu.memory_space<vmem>>, %arg3: memref<1x1664xf32, #tpu.memory_space<vmem>>) attributes {dimension_semantics = [], scalar_prefetch = 0 : i64, scratch_operands = 0 : i64, tpu.core_type = #tpu.core_type<tc>} {
    %c0 = arith.constant 0 : index
    %c0_0 = arith.constant 0 : index
    %0 = vector.load %arg0[%c0, %c0_0] : memref<1x32xbf16, #tpu.memory_space<vmem>>, vector<1x32xbf16>
    %c0_1 = arith.constant 0 : index
    %c0_2 = arith.constant 0 : index
    %1 = vector.load %arg1[%c0_1, %c0_2] : memref<32x1664xbf16, #tpu.memory_space<vmem>>, vector<32x1664xbf16>
    %cst = arith.constant dense<0.000000e+00> : vector<1x1664xf32>
    %2 = tpu.matmul %0, %1, %cst {dimension_numbers = #tpu.dot_dimension_numbers<[1], [0], [0], [1], [0, 0, 1, 1], [], []>} : vector<1x32xbf16>, vector<32x1664xbf16>, vector<1x1664xf32> -> vector<1x1664xf32>
    %c0_3 = arith.constant 0 : index
    %c0_4 = arith.constant 0 : index
    %3 = vector.load %arg2[%c0_3, %c0_4] : memref<1x1664xf32, #tpu.memory_space<vmem>>, vector<1x1664xf32>
    %4 = arith.addf %2, %3 : vector<1x1664xf32>
    %c0_5 = arith.constant 0 : index
    %c0_6 = arith.constant 0 : index
    %5 = vector.load %arg3[%c0_5, %c0_6] : memref<1x1664xf32, #tpu.memory_space<vmem>>, vector<1x1664xf32>
    tpu.vector_store %arg3[%c0_5, %c0_6], %4 {strides = array<i32>} : memref<1x1664xf32, #tpu.memory_space<vmem>>, vector<1x1664xf32>,
    return
  }
}

</mosaic_0001>

<llo_original>
// kernel: forward.1
$region0: #{forward.1}
  #allocation0 [shape = 'u32[]', space=smem, size = 0x4, offset = 0x4, fixed_abs, tag = 'smem constant byte address 0x4 - core index']
  #allocation1 [shape = 'u32[144,128]{1,0:T(1,128)}', space=vmem, size = 0x12000, scoped, tag = 'internal scratch']
  %s0 = inlined_call_operand.vmem [shape: bf16[1,32], index: 0, kind: input, shape index: {}]
  %s1 = inlined_call_operand.hbm [shape: bf16[32,1664], index: 1, kind: input, shape index: {}]
  %s2 = inlined_call_operand.hbm [shape: f32[1,1664], index: 2, kind: input, shape index: {}]
  %s3 = inlined_call_operand.vmem [shape: f32[1,1664], index: 3, kind: output, shape index: {}]
  %s4 = sld [smem:[#allocation0]]
  $region30: #{forward.1} parent=0
    _
  %s6 = ssub.s32 1, %s4
  %s7 = scalar_select 0, %s6, %s4
  $region1: #{forward.1} parent=0
    #allocation2 [shape = 'u8[106496]{0}', space=vmem, size = 0x1a000, scoped, tag = 'input window, operand 1, single buffered']
    #allocation3 [shape = 's32[1]{0}', space=sflag, size = 0x4, scoped, tag = 'scoped memory for forward.1']
    #allocation4 [shape = 'u8[6656]{0}', space=vmem, size = 0x1c00, scoped, tag = 'input window, operand 2, single buffered']
    #allocation5 [shape = 's32[1]{0}', space=sflag, size = 0x4, scoped, tag = 'scoped memory for forward.1']
    %8 = vsyncpa [#allocation3], 0
    %9 = vsyncpa [#allocation5], 0
    // Predicated region
    $region2: #{forward.1} parent=1 // pred_check
      _
    $region3: #{forward.1} parent=1 // pred_check_branch
      %11 = sbr.rel (0) target = $region5
    $region4: #{forward.1} parent=1 // pred_region
      _
    $region5: #{forward.1} parent=1 // pred_fallthru
      _
    // Predicated region
    $region6: #{forward.1} parent=1 // pred_check
      _
    $region7: #{forward.1} parent=1 // pred_check_branch
      %13 = sbr.rel (0) target = $region9
    $region8: #{forward.1} parent=1 // pred_region
      %s15 = ssub.s32 3328, 3328
      %16 = vsyncadd [#allocation3], %s15
      %s17 = sshll.u32 [#allocation2], 4
      %s18 = int_to_ptr.vmem [resolvable:$true] %s17
      %23 = dma.hbm_to_vmem [thread:$0]  %s1, 3328, %s18, [#allocation3], 832, 832, 52
    $region9: #{forward.1} parent=1 // pred_fallthru
      _
    // Predicated region
    $region10: #{forward.1} parent=1 // pred_check
      _
    $region11: #{forward.1} parent=1 // pred_check_branch
      %25 = sbr.rel (0) target = $region13
    $region12: #{forward.1} parent=1 // pred_region
      %s27 = ssub.s32 208, 208
      %28 = vsyncadd [#allocation5], %s27
      %s30 = sshll.u32 [#allocation4], 4
      %s31 = int_to_ptr.vmem [resolvable:$true] %s30
      %33 = dma.hbm_to_vmem [thread:$0]  %s2, 208, %s31, [#allocation5]
    $region13: #{forward.1} parent=1 // pred_fallthru
      _
    // Predicated region
    $region14: #{forward.1} parent=1 // pred_check
      _
    $region15: #{forward.1} parent=1 // pred_check_branch
      %35 = sbr.rel (0) target = $region17
    $region16: #{forward.1} parent=1 // pred_region
      %36 = dma.done [#allocation3], 3328
    $region17: #{forward.1} parent=1 // pred_fallthru
      _
    // Predicated region
    $region18: #{forward.1} parent=1 // pred_check
      _
    $region19: #{forward.1} parent=1 // pred_check_branch
      %38 = sbr.rel (0) target = $region21
    $region20: #{forward.1} parent=1 // pred_region
      %39 = dma.done [#allocation5], 208
    $region21: #{forward.1} parent=1 // pred_fallthru
      _
    %v41 = vld [vmem:[%s0] sm:$0x1]
    %v42 = vld [vmem:[#allocation2] sm:$0xff]
    %v43 = vld [vmem:[#allocation2 + $0x8] sm:$0xff]
    %v44 = vld [vmem:[#allocation2 + $0x10] sm:$0xff]
    %v45 = vld [vmem:[#allocation2 + $0x18] sm:$0xff]
    %v46 = vld [vmem:[#allocation2 + $0x20] sm:$0xff]
    %v47 = vld [vmem:[#allocation2 + $0x28] sm:$0xff]
    %v48 = vld [vmem:[#allocation2 + $0x30] sm:$0xf]
    %v49 = vld [vmem:[#allocation2 + $0x34] sm:$0xff]
    %v50 = vld [vmem:[#allocation2 + $0x3c] sm:$0xff]
    %v51 = vld [vmem:[#allocation2 + $0x44] sm:$0xff]
    %v52 = vld [vmem:[#allocation2 + $0x4c] sm:$0xff]
    %v53 = vld [vmem:[#allocation2 + $0x54] sm:$0xff]
    %v54 = vld [vmem:[#allocation2 + $0x5c] sm:$0xff]
    %v55 = vld [vmem:[#allocation2 + $0x64] sm:$0xf]
    %v56 = vld [vmem:[#allocation2 + $0x68] sm:$0xff]
    %v57 = vld [vmem:[#allocation2 + $0x70] sm:$0xff]
    %v58 = vld [vmem:[#allocation2 + $0x78] sm:$0xff]
    %v59 = vld [vmem:[#allocation2 + $0x80] sm:$0xff]
    %v60 = vld [vmem:[#allocation2 + $0x88] sm:$0xff]
    %v61 = vld [vmem:[#allocation2 + $0x90] sm:$0xff]
    %v62 = vld [vmem:[#allocation2 + $0x98] sm:$0xf]
    %v63 = vld [vmem:[#allocation2 + $0x9c] sm:$0xff]
    %v64 = vld [vmem:[#allocation2 + $0xa4] sm:$0xff]
    %v65 = vld [vmem:[#allocation2 + $0xac] sm:$0xff]
    %v66 = vld [vmem:[#allocation2 + $0xb4] sm:$0xff]
    %v67 = vld [vmem:[#allocation2 + $0xbc] sm:$0xff]
    %v68 = vld [vmem:[#allocation2 + $0xc4] sm:$0xff]
    %v69 = vld [vmem:[#allocation2 + $0xcc] sm:$0xf]
    %v70 = vld [vmem:[#allocation4] sm:$0xff]
    %v71 = vld [vmem:[#allocation4 + $0x8] sm:$0x1f]
    %v100 = vunpack.c.l.b16 %v42
    %v101 = vunpack.c.h.b16 %v42
    %v102 = vunpack.c.l.b16 %v43
    %v103 = vunpack.c.h.b16 %v43
    %v104 = vunpack.c.l.b16 %v44
    %v105 = vunpack.c.h.b16 %v44
    %v106 = vunpack.c.l.b16 %v45
    %v107 = vunpack.c.h.b16 %v45
    %v108 = vunpack.c.l.b16 %v46
    %v109 = vunpack.c.h.b16 %v46
    %v110 = vunpack.c.l.b16 %v47
    %v111 = vunpack.c.h.b16 %v47
    %v112 = vunpack.c.l.b16 %v48
    %v113 = vunpack.c.l.b16 %v49
    %v114 = vunpack.c.h.b16 %v49
    %v115 = vunpack.c.l.b16 %v50
    %v116 = vunpack.c.h.b16 %v50
    %v117 = vunpack.c.l.b16 %v51
    %v118 = vunpack.c.h.b16 %v51
    %v119 = vunpack.c.l.b16 %v52
    %v120 = vunpack.c.h.b16 %v52
    %v121 = vunpack.c.l.b16 %v53
    %v122 = vunpack.c.h.b16 %v53
    %v123 = vunpack.c.l.b16 %v54
    %v124 = vunpack.c.h.b16 %v54
    %v125 = vunpack.c.l.b16 %v55
    %v126 = vunpack.c.l.b16 %v56
    %v127 = vunpack.c.h.b16 %v56
    %v128 = vunpack.c.l.b16 %v57
    %v129 = vunpack.c.h.b16 %v57
    %v130 = vunpack.c.l.b16 %v58
    %v131 = vunpack.c.h.b16 %v58
    %v132 = vunpack.c.l.b16 %v59
    %v133 = vunpack.c.h.b16 %v59
    %v134 = vunpack.c.l.b16 %v60
    %v135 = vunpack.c.h.b16 %v60
    %v136 = vunpack.c.l.b16 %v61
    %v137 = vunpack.c.h.b16 %v61
    %v138 = vunpack.c.l.b16 %v62
    %v139 = vunpack.c.l.b16 %v63
    %v140 = vunpack.c.h.b16 %v63
    %v141 = vunpack.c.l.b16 %v64
    %v142 = vunpack.c.h.b16 %v64
    %v143 = vunpack.c.l.b16 %v65
    %v144 = vunpack.c.h.b16 %v65
    %v145 = vunpack.c.l.b16 %v66
    %v146 = vunpack.c.h.b16 %v66
    %v147 = vunpack.c.l.b16 %v67
    %v148 = vunpack.c.h.b16 %v67
    %v149 = vunpack.c.l.b16 %v68
    %v150 = vunpack.c.h.b16 %v68
    %v151 = vunpack.c.l.b16 %v69
    %v152 = vpack.c.b16 %v113, %v100
    %v153 = vpack.c.b16 %v114, %v101
    %v154 = vpack.c.b16 %v115, %v102
    %v155 = vpack.c.b16 %v116, %v103
    %v156 = vpack.c.b16 %v117, %v104
    %v157 = vpack.c.b16 %v118, %v105
    %v158 = vpack.c.b16 %v119, %v106
    %v159 = vpack.c.b16 %v120, %v107
    %v160 = vpack.c.b16 %v121, %v108
    %v161 = vpack.c.b16 %v122, %v109
    %v162 = vpack.c.b16 %v123, %v110
    %v163 = vpack.c.b16 %v124, %v111
    %v164 = vpack.c.b16 %v125, %v112
    %v165 = vpack.c.b16 %v139, %v126
    %v166 = vpack.c.b16 %v140, %v127
    %v167 = vpack.c.b16 %v141, %v128
    %v168 = vpack.c.b16 %v142, %v129
    %v169 = vpack.c.b16 %v143, %v130
    %v170 = vpack.c.b16 %v144, %v131
    %v171 = vpack.c.b16 %v145, %v132
    %v172 = vpack.c.b16 %v146, %v133
    %v173 = vpack.c.b16 %v147, %v134
    %v174 = vpack.c.b16 %v148, %v135
    %v175 = vpack.c.b16 %v149, %v136
    %v176 = vpack.c.b16 %v150, %v137
    %v177 = vpack.c.b16 %v151, %v138
    %v206 = vlaneseq
    %v207 = vshrl.u32 %v206, 7
    %v208 = vsub.s32 0, %v207
    %v209 = vrot.slane %v70, %v208
    %v210 = vlaneseq
    %v211 = vshrl.u32 %v210, 7
    %v212 = vsub.s32 1, %v211
    %v213 = vrot.slane %v70, %v212
    %v214 = vlaneseq
    %v215 = vshrl.u32 %v214, 7
    %v216 = vsub.s32 2, %v215
    %v217 = vrot.slane %v70, %v216
    %v218 = vlaneseq
    %v219 = vshrl.u32 %v218, 7
    %v220 = vsub.s32 3, %v219
    %v221 = vrot.slane %v70, %v220
    %v222 = vlaneseq
    %v223 = vshrl.u32 %v222, 7
    %v224 = vsub.s32 4, %v223
    %v225 = vrot.slane %v70, %v224
    %v226 = vlaneseq
    %v227 = vshrl.u32 %v226, 7
    %v228 = vsub.s32 5, %v227
    %v229 = vrot.slane %v70, %v228
    %v230 = vlaneseq
    %v231 = vshrl.u32 %v230, 7
    %v232 = vsub.s32 6, %v231
    %v233 = vrot.slane %v70, %v232
    %v234 = vlaneseq
    %v235 = vshrl.u32 %v234, 7
    %v236 = vsub.s32 7, %v235
    %v237 = vrot.slane %v70, %v236
    %v238 = vlaneseq
    %v239 = vshrl.u32 %v238, 7
    %v240 = vsub.s32 0, %v239
    %v241 = vrot.slane %v71, %v240
    %v242 = vlaneseq
    %v243 = vshrl.u32 %v242, 7
    %v244 = vsub.s32 1, %v243
    %v245 = vrot.slane %v71, %v244
    %v246 = vlaneseq
    %v247 = vshrl.u32 %v246, 7
    %v248 = vsub.s32 2, %v247
    %v249 = vrot.slane %v71, %v248
    %v250 = vlaneseq
    %v251 = vshrl.u32 %v250, 7
    %v252 = vsub.s32 3, %v251
    %v253 = vrot.slane %v71, %v252
    %v254 = vlaneseq
    %v255 = vshrl.u32 %v254, 7
    %v256 = vsub.s32 4, %v255
    %v257 = vrot.slane %v71, %v256
    %vm271 = vcmask 261120
    %v273 = vsel %vm271, %v41, 0
    %275 = vmatprep.subr.bf16.mxu0 %v153
    %276 = vmatpush1.bf16.msra.mxu0 %v152
    %277 = vmatprep.subr.bf16.mxu0 %v166
    %278 = vmatpush1.bf16.msra.mxu0 %v165
    %279 = vmatprep.subr.bf16.mxu0 0
    %280 = vmatpush1.bf16.msra.mxu0 0
    %281 = vmatprep.subr.bf16.mxu0 0
    %282 = vmatpush1.bf16.msra.mxu0 0
    %283 = vmatprep.subr.bf16.mxu0 0
    %284 = vmatpush1.bf16.msra.mxu0 0
    %285 = vmatprep.subr.bf16.mxu0 0
    %286 = vmatpush1.bf16.msra.mxu0 0
    %287 = vmatprep.subr.bf16.mxu0 0
    %288 = vmatpush1.bf16.msra.mxu0 0
    %289 = vmatprep.subr.bf16.mxu0 0
    %290 = vmatpush1.bf16.msra.mxu0 0
    %291 = vmatprep.subr.bf16.mxu0 0
    %292 = vmatpush1.bf16.msra.mxu0 0
    %293 = vmatprep.subr.bf16.mxu0 0
    %294 = vmatpush1.bf16.msra.mxu0 0
    %295 = vmatprep.subr.bf16.mxu0 0
    %296 = vmatpush1.bf16.msra.mxu0 0
    %297 = vmatprep.subr.bf16.mxu0 0
    %298 = vmatpush1.bf16.msra.mxu0 0
    %299 = vmatprep.subr.bf16.mxu0 0
    %300 = vmatpush1.bf16.msra.mxu0 0
    %301 = vmatprep.subr.bf16.mxu0 0
    %302 = vmatpush1.bf16.msra.mxu0 0
    %303 = vmatprep.subr.bf16.mxu0 0
    %304 = vmatpush1.bf16.msra.mxu0 0
    %305 = vmatprep.subr.bf16.mxu0 0
    %306 = vmatpush1.bf16.msra.mxu0 0
    %307 = vmatprep.mubr.bf16.mxu0 0
    %308 = vmatmul.mubr.bf16.gmra.mrb[0].mxu0 %v273
    %v309 = vpop.f32.mrb[0].mxu0
    %v310 = vadd.f32 %v209, %v309
    %v311 = vpop.f32.mrb[0].mxu0
    %v312 = vadd.f32 %v213, %v311
    %v313 = vpop.f32.mrb[0].mxu0
    %v314 = vpop.f32.mrb[0].mxu0
    %315 = vdwg.mxu0
    %316 = vmatprep.subr.bf16.mxu0 %v155
    %317 = vmatpush1.bf16.msra.mxu0 %v154
    %318 = vmatprep.subr.bf16.mxu0 %v168
    %319 = vmatpush1.bf16.msra.mxu0 %v167
    %320 = vmatprep.subr.bf16.mxu0 0
    %321 = vmatpush1.bf16.msra.mxu0 0
    %322 = vmatprep.subr.bf16.mxu0 0
    %323 = vmatpush1.bf16.msra.mxu0 0
    %324 = vmatprep.subr.bf16.mxu0 0
    %325 = vmatpush1.bf16.msra.mxu0 0
    %326 = vmatprep.subr.bf16.mxu0 0
    %327 = vmatpush1.bf16.msra.mxu0 0
    %328 = vmatprep.subr.bf16.mxu0 0
    %329 = vmatpush1.bf16.msra.mxu0 0
    %330 = vmatprep.subr.bf16.mxu0 0
    %331 = vmatpush1.bf16.msra.mxu0 0
    %332 = vmatprep.subr.bf16.mxu0 0
    %333 = vmatpush1.bf16.msra.mxu0 0
    %334 = vmatprep.subr.bf16.mxu0 0
    %335 = vmatpush1.bf16.msra.mxu0 0
    %336 = vmatprep.subr.bf16.mxu0 0
    %337 = vmatpush1.bf16.msra.mxu0 0
    %338 = vmatprep.subr.bf16.mxu0 0
    %339 = vmatpush1.bf16.msra.mxu0 0
    %340 = vmatprep.subr.bf16.mxu0 0
    %341 = vmatpush1.bf16.msra.mxu0 0
    %342 = vmatprep.subr.bf16.mxu0 0
    %343 = vmatpush1.bf16.msra.mxu0 0
    %344 = vmatprep.subr.bf16.mxu0 0
    %345 = vmatpush1.bf16.msra.mxu0 0
    %346 = vmatprep.subr.bf16.mxu0 0
    %347 = vmatpush1.bf16.msra.mxu0 0
    %348 = vmatprep.mubr.bf16.mxu0 0
    %349 = vmatmul.mubr.bf16.gmra.mrb[0].mxu0 %v273
    %v350 = vpop.f32.mrb[0].mxu0
    %v351 = vadd.f32 %v217, %v350
    %v352 = vpop.f32.mrb[0].mxu0
    %v353 = vadd.f32 %v221, %v352
    %v354 = vpop.f32.mrb[0].mxu0
    %v355 = vpop.f32.mrb[0].mxu0
    %356 = vdwg.mxu0
    %357 = vmatprep.subr.bf16.mxu0 %v157
    %358 = vmatpush1.bf16.msra.mxu0 %v156
    %359 = vmatprep.subr.bf16.mxu0 %v170
    %360 = vmatpush1.bf16.msra.mxu0 %v169
    %361 = vmatprep.subr.bf16.mxu0 0
    %362 = vmatpush1.bf16.msra.mxu0 0
    %363 = vmatprep.subr.bf16.mxu0 0
    %364 = vmatpush1.bf16.msra.mxu0 0
    %365 = vmatprep.subr.bf16.mxu0 0
    %366 = vmatpush1.bf16.msra.mxu0 0
    %367 = vmatprep.subr.bf16.mxu0 0
    %368 = vmatpush1.bf16.msra.mxu0 0
    %369 = vmatprep.subr.bf16.mxu0 0
    %370 = vmatpush1.bf16.msra.mxu0 0
    %371 = vmatprep.subr.bf16.mxu0 0
    %372 = vmatpush1.bf16.msra.mxu0 0
    %373 = vmatprep.subr.bf16.mxu0 0
    %374 = vmatpush1.bf16.msra.mxu0 0
    %375 = vmatprep.subr.bf16.mxu0 0
    %376 = vmatpush1.bf16.msra.mxu0 0
    %377 = vmatprep.subr.bf16.mxu0 0
    %378 = vmatpush1.bf16.msra.mxu0 0
    %379 = vmatprep.subr.bf16.mxu0 0
    %380 = vmatpush1.bf16.msra.mxu0 0
    %381 = vmatprep.subr.bf16.mxu0 0
    %382 = vmatpush1.bf16.msra.mxu0 0
    %383 = vmatprep.subr.bf16.mxu0 0
    %384 = vmatpush1.bf16.msra.mxu0 0
    %385 = vmatprep.subr.bf16.mxu0 0
    %386 = vmatpush1.bf16.msra.mxu0 0
    %387 = vmatprep.subr.bf16.mxu0 0
    %388 = vmatpush1.bf16.msra.mxu0 0
    %389 = vmatprep.mubr.bf16.mxu0 0
    %390 = vmatmul.mubr.bf16.gmra.mrb[0].mxu0 %v273
    %v391 = vpop.f32.mrb[0].mxu0
    %v392 = vadd.f32 %v225, %v391
    %v393 = vpop.f32.mrb[0].mxu0
    %v394 = vadd.f32 %v229, %v393
    %v395 = vpop.f32.mrb[0].mxu0
    %v396 = vpop.f32.mrb[0].mxu0
    %397 = vdwg.mxu0
    %398 = vmatprep.subr.bf16.mxu0 %v159
    %399 = vmatpush1.bf16.msra.mxu0 %v158
    %400 = vmatprep.subr.bf16.mxu0 %v172
    %401 = vmatpush1.bf16.msra.mxu0 %v171
    %402 = vmatprep.subr.bf16.mxu0 0
    %403 = vmatpush1.bf16.msra.mxu0 0
    %404 = vmatprep.subr.bf16.mxu0 0
    %405 = vmatpush1.bf16.msra.mxu0 0
    %406 = vmatprep.subr.bf16.mxu0 0
    %407 = vmatpush1.bf16.msra.mxu0 0
    %408 = vmatprep.subr.bf16.mxu0 0
    %409 = vmatpush1.bf16.msra.mxu0 0
    %410 = vmatprep.subr.bf16.mxu0 0
    %411 = vmatpush1.bf16.msra.mxu0 0
    %412 = vmatprep.subr.bf16.mxu0 0
    %413 = vmatpush1.bf16.msra.mxu0 0
    %414 = vmatprep.subr.bf16.mxu0 0
    %415 = vmatpush1.bf16.msra.mxu0 0
    %416 = vmatprep.subr.bf16.mxu0 0
    %417 = vmatpush1.bf16.msra.mxu0 0
    %418 = vmatprep.subr.bf16.mxu0 0
    %419 = vmatpush1.bf16.msra.mxu0 0
    %420 = vmatprep.subr.bf16.mxu0 0
    %421 = vmatpush1.bf16.msra.mxu0 0
    %422 = vmatprep.subr.bf16.mxu0 0
    %423 = vmatpush1.bf16.msra.mxu0 0
    %424 = vmatprep.subr.bf16.mxu0 0
    %425 = vmatpush1.bf16.msra.mxu0 0
    %426 = vmatprep.subr.bf16.mxu0 0
    %427 = vmatpush1.bf16.msra.mxu0 0
    %428 = vmatprep.subr.bf16.mxu0 0
    %429 = vmatpush1.bf16.msra.mxu0 0
    %430 = vmatprep.mubr.bf16.mxu0 0
    %431 = vmatmul.mubr.bf16.gmra.mrb[0].mxu0 %v273
    %v432 = vpop.f32.mrb[0].mxu0
    %v433 = vadd.f32 %v233, %v432
    %v434 = vpop.f32.mrb[0].mxu0
    %v435 = vadd.f32 %v237, %v434
    %v436 = vpop.f32.mrb[0].mxu0
    %v437 = vpop.f32.mrb[0].mxu0
    %438 = vdwg.mxu0
    %439 = vmatprep.subr.bf16.mxu0 %v161
    %440 = vmatpush1.bf16.msra.mxu0 %v160
    %441 = vmatprep.subr.bf16.mxu0 %v174
    %442 = vmatpush1.bf16.msra.mxu0 %v173
    %443 = vmatprep.subr.bf16.mxu0 0
    %444 = vmatpush1.bf16.msra.mxu0 0
    %445 = vmatprep.subr.bf16.mxu0 0
    %446 = vmatpush1.bf16.msra.mxu0 0
    %447 = vmatprep.subr.bf16.mxu0 0
    %448 = vmatpush1.bf16.msra.mxu0 0
    %449 = vmatprep.subr.bf16.mxu0 0
    %450 = vmatpush1.bf16.msra.mxu0 0
    %451 = vmatprep.subr.bf16.mxu0 0
    %452 = vmatpush1.bf16.msra.mxu0 0
    %453 = vmatprep.subr.bf16.mxu0 0
    %454 = vmatpush1.bf16.msra.mxu0 0
    %455 = vmatprep.subr.bf16.mxu0 0
    %456 = vmatpush1.bf16.msra.mxu0 0
    %457 = vmatprep.subr.bf16.mxu0 0
    %458 = vmatpush1.bf16.msra.mxu0 0
    %459 = vmatprep.subr.bf16.mxu0 0
    %460 = vmatpush1.bf16.msra.mxu0 0
    %461 = vmatprep.subr.bf16.mxu0 0
    %462 = vmatpush1.bf16.msra.mxu0 0
    %463 = vmatprep.subr.bf16.mxu0 0
    %464 = vmatpush1.bf16.msra.mxu0 0
    %465 = vmatprep.subr.bf16.mxu0 0
    %466 = vmatpush1.bf16.msra.mxu0 0
    %467 = vmatprep.subr.bf16.mxu0 0
    %468 = vmatpush1.bf16.msra.mxu0 0
    %469 = vmatprep.subr.bf16.mxu0 0
    %470 = vmatpush1.bf16.msra.mxu0 0
    %471 = vmatprep.mubr.bf16.mxu0 0
    %472 = vmatmul.mubr.bf16.gmra.mrb[0].mxu0 %v273
    %v473 = vpop.f32.mrb[0].mxu0
    %v474 = vadd.f32 %v241, %v473
    %v475 = vpop.f32.mrb[0].mxu0
    %v476 = vadd.f32 %v245, %v475
    %v477 = vpop.f32.mrb[0].mxu0
    %v478 = vpop.f32.mrb[0].mxu0
    %479 = vdwg.mxu0
    %480 = vmatprep.subr.bf16.mxu0 %v163
    %481 = vmatpush1.bf16.msra.mxu0 %v162
    %482 = vmatprep.subr.bf16.mxu0 %v176
    %483 = vmatpush1.bf16.msra.mxu0 %v175
    %484 = vmatprep.subr.bf16.mxu0 0
    %485 = vmatpush1.bf16.msra.mxu0 0
    %486 = vmatprep.subr.bf16.mxu0 0
    %487 = vmatpush1.bf16.msra.mxu0 0
    %488 = vmatprep.subr.bf16.mxu0 0
    %489 = vmatpush1.bf16.msra.mxu0 0
    %490 = vmatprep.subr.bf16.mxu0 0
    %491 = vmatpush1.bf16.msra.mxu0 0
    %492 = vmatprep.subr.bf16.mxu0 0
    %493 = vmatpush1.bf16.msra.mxu0 0
    %494 = vmatprep.subr.bf16.mxu0 0
    %495 = vmatpush1.bf16.msra.mxu0 0
    %496 = vmatprep.subr.bf16.mxu0 0
    %497 = vmatpush1.bf16.msra.mxu0 0
    %498 = vmatprep.subr.bf16.mxu0 0
    %499 = vmatpush1.bf16.msra.mxu0 0
    %500 = vmatprep.subr.bf16.mxu0 0
    %501 = vmatpush1.bf16.msra.mxu0 0
    %502 = vmatprep.subr.bf16.mxu0 0
    %503 = vmatpush1.bf16.msra.mxu0 0
    %504 = vmatprep.subr.bf16.mxu0 0
    %505 = vmatpush1.bf16.msra.mxu0 0
    %506 = vmatprep.subr.bf16.mxu0 0
    %507 = vmatpush1.bf16.msra.mxu0 0
    %508 = vmatprep.subr.bf16.mxu0 0
    %509 = vmatpush1.bf16.msra.mxu0 0
    %510 = vmatprep.subr.bf16.mxu0 0
    %511 = vmatpush1.bf16.msra.mxu0 0
    %512 = vmatprep.mubr.bf16.mxu0 0
    %513 = vmatmul.mubr.bf16.gmra.mrb[0].mxu0 %v273
    %v514 = vpop.f32.mrb[0].mxu0
    %v515 = vadd.f32 %v249, %v514
    %v516 = vpop.f32.mrb[0].mxu0
    %v517 = vadd.f32 %v253, %v516
    %v518 = vpop.f32.mrb[0].mxu0
    %v519 = vpop.f32.mrb[0].mxu0
    %520 = vdwg.mxu0
    %521 = vmatprep.subr.bf16.mxu0 0
    %522 = vmatpush1.bf16.msra.mxu0 %v164
    %523 = vmatprep.subr.bf16.mxu0 0
    %524 = vmatpush1.bf16.msra.mxu0 %v177
    %525 = vmatprep.subr.bf16.mxu0 0
    %526 = vmatpush1.bf16.msra.mxu0 0
    %527 = vmatprep.subr.bf16.mxu0 0
    %528 = vmatpush1.bf16.msra.mxu0 0
    %529 = vmatprep.subr.bf16.mxu0 0
    %530 = vmatpush1.bf16.msra.mxu0 0
    %531 = vmatprep.subr.bf16.mxu0 0
    %532 = vmatpush1.bf16.msra.mxu0 0
    %533 = vmatprep.subr.bf16.mxu0 0
    %534 = vmatpush1.bf16.msra.mxu0 0
    %535 = vmatprep.subr.bf16.mxu0 0
    %536 = vmatpush1.bf16.msra.mxu0 0
    %537 = vmatprep.subr.bf16.mxu0 0
    %538 = vmatpush1.bf16.msra.mxu0 0
    %539 = vmatprep.subr.bf16.mxu0 0
    %540 = vmatpush1.bf16.msra.mxu0 0
    %541 = vmatprep.subr.bf16.mxu0 0
    %542 = vmatpush1.bf16.msra.mxu0 0
    %543 = vmatprep.subr.bf16.mxu0 0
    %544 = vmatpush1.bf16.msra.mxu0 0
    %545 = vmatprep.subr.bf16.mxu0 0
    %546 = vmatpush1.bf16.msra.mxu0 0
    %547 = vmatprep.subr.bf16.mxu0 0
    %548 = vmatpush1.bf16.msra.mxu0 0
    %549 = vmatprep.subr.bf16.mxu0 0
    %550 = vmatpush1.bf16.msra.mxu0 0
    %551 = vmatprep.subr.bf16.mxu0 0
    %552 = vmatpush1.bf16.msra.mxu0 0
    %553 = vmatprep.mubr.bf16.mxu0 0
    %554 = vmatmul.mubr.bf16.gmra.mrb[0].mxu0 %v273
    %v555 = vpop.f32.mrb[0].mxu0
    %v556 = vadd.f32 %v257, %v555
    %v557 = vpop.f32.mrb[0].mxu0
    %v558 = vpop.f32.mrb[0].mxu0
    %v559 = vpop.f32.mrb[0].mxu0
    %560 = vdwg.mxu0
    %v574 = vcombine.low %v310, %v312
    %v575 = vcombine.low %v351, %v353
    %v576 = vcombine.low %v392, %v394
    %v577 = vcombine.low %v433, %v435
    %v579 = vunpack.c.l.s4 1966171168
    %v580 = vunpack.c.0.s8 %v579
    %v581 = vlaneseq
    %v582 = vshrl.u32 %v581, 7
    %v583 = vsub.s32 %v580, %v582
    %v584 = vrot.slane %v574, %v583
    %v586 = vunpack.c.l.s4 1966171168
    %v587 = vunpack.c.0.s8 %v586
    %v588 = vlaneseq
    %v589 = vshrl.u32 %v588, 7
    %v590 = vsub.s32 %v587, %v589
    %v591 = vrot.slane %v575, %v590
    %v593 = vunpack.c.l.s4 1966171168
    %v594 = vunpack.c.0.s8 %v593
    %v595 = vlaneseq
    %v596 = vshrl.u32 %v595, 7
    %v597 = vsub.s32 %v594, %v596
    %v598 = vrot.slane %v576, %v597
    %v600 = vunpack.c.l.s4 1966171168
    %v601 = vunpack.c.0.s8 %v600
    %v602 = vlaneseq
    %v603 = vshrl.u32 %v602, 7
    %v604 = vsub.s32 %v601, %v603
    %v605 = vrot.slane %v577, %v604
    %v606 = vcombine.low %v584, %v591
    %v607 = vcombine.low %v598, %v605
    %v609 = vunpack.c.l.s4 1966171168
    %v610 = vunpack.c.0.s8 %v609
    %v611 = vlaneseq
    %v612 = vshrl.u32 %v611, 7
    %v613 = vsub.s32 %v610, %v612
    %v614 = vrot.slane %v606, %v613
    %v616 = vunpack.c.l.s4 1966171168
    %v617 = vunpack.c.0.s8 %v616
    %v618 = vlaneseq
    %v619 = vshrl.u32 %v618, 7
    %v620 = vsub.s32 %v617, %v619
    %v621 = vrot.slane %v607, %v620
    %v622 = vcombine.low %v614, %v621
    %v623 = vcombine.low %v474, %v476
    %v624 = vcombine.low %v515, %v517
    %v626 = vunpack.c.l.s4 1966171168
    %v627 = vunpack.c.0.s8 %v626
    %v628 = vlaneseq
    %v629 = vshrl.u32 %v628, 7
    %v630 = vsub.s32 %v627, %v629
    %v631 = vrot.slane %v623, %v630
    %v633 = vunpack.c.l.s4 1966171168
    %v634 = vunpack.c.0.s8 %v633
    %v635 = vlaneseq
    %v636 = vshrl.u32 %v635, 7
    %v637 = vsub.s32 %v634, %v636
    %v638 = vrot.slane %v624, %v637
    %v640 = vunpack.c.l.s4 1966171168
    %v641 = vunpack.c.0.s8 %v640
    %v642 = vlaneseq
    %v643 = vshrl.u32 %v642, 7
    %v644 = vsub.s32 %v641, %v643
    %v645 = vrot.slane %v556, %v644
    %v646 = vcombine.low %v631, %v638
    %v648 = vunpack.c.l.s4 1966171168
    %v649 = vunpack.c.0.s8 %v648
    %v650 = vlaneseq
    %v651 = vshrl.u32 %v650, 7
    %v652 = vsub.s32 %v649, %v651
    %v653 = vrot.slane %v646, %v652
    %v655 = vunpack.c.l.s4 1966171168
    %v656 = vunpack.c.0.s8 %v655
    %v657 = vlaneseq
    %v658 = vshrl.u32 %v657, 7
    %v659 = vsub.s32 %v656, %v658
    %v660 = vrot.slane %v645, %v659
    %v661 = vcombine.low %v653, %v660
    %664 = vst [vmem:[%s3] sm:$0xff] %v622
    %v665 = vlaneseq
    %vm666 = vcmp.ge.s32.totalorder %v665, 0
    %vm667 = vcmp.lt.s32.totalorder %v665, 640
    %vm668 = vmand %vm666, %vm667
    %669 = vst.msk [vmem:[%s3 + $0x8] sm:$0x1f] %vm668, %v661
    // Predicated region
    $region22: #{forward.1} parent=1 // pred_check
      _
    $region23: #{forward.1} parent=1 // pred_check_branch
      %671 = sbr.rel (0) target = $region25
    $region24: #{forward.1} parent=1 // pred_region
      _
    $region25: #{forward.1} parent=1 // pred_fallthru
      _
    // Predicated region
    $region26: #{forward.1} parent=1 // pred_check
      _
    $region27: #{forward.1} parent=1 // pred_check_branch
      %673 = sbr.rel (0) target = $region29
    $region28: #{forward.1} parent=1 // pred_region
      _
    $region29: #{forward.1} parent=1 // pred_fallthru
      _
    %674 = vsyncpa [#allocation3], 1
    %675 = vsyncpa [#allocation5], 1

</llo_original>
